<compile_context>
chip_gen: v7x
topology: tpu7x:2x2x1
jax: 0.10.0
libtpu: 0.0.40
codegen_flags: <defaults>
</compile_context>

<pallas_src>
import numpy as np
import jax
import jax.numpy as jnp
from jax.experimental import pallas as pl
from jax.experimental.pallas import tpu as pltpu

LEAKY_SLOPE = 0.01   # nn.LeakyReLU default negative_slope
BN_EPS = 1e-5        # nn.BatchNorm1d default eps


def _padding(downsample, kernel_size):
    """Same as the PyTorch module."""
    return max(0, int(np.floor((kernel_size - downsample + 1) / 2)))


def _pad_len(v, before, after):
    """Zero-pad a (B, L, C) value along axis=1 with static amounts (register level)."""
    B, _, C = v.shape
    parts = []
    if before > 0:
        parts.append(jnp.zeros((B, before, C), v.dtype))
    parts.append(v)
    if after > 0:
        parts.append(jnp.zeros((B, after, C), v.dtype))
    return jnp.concatenate(parts, axis=1) if len(parts) > 1 else v


def _make_kernel(BT, L, L2, C_in, C_out, k, ds, p1, p2, Lg, has_pool, has_1x1, out_dtype):
    Lp2r = Lg * ds  # rounded (to multiple of ds) length of the conv2 input incl. halo

    def kernel(*refs):
        if has_1x1:
            x_ref, y_ref, w1_ref, w2_ref, wsk_ref, bn_ref, xo_ref, yo_ref = refs
        else:
            x_ref, y_ref, w1_ref, w2_ref, bn_ref, xo_ref, yo_ref = refs
            wsk_ref = None

        bn = bn_ref[...]   # (3, C_out) f32: [bn1 shift (scale folded in w1) | bn2 scale | bn2 shift]

        # ---- conv1 (stride 1, "same" padding) as one im2col matmul + BN1 + LeakyReLU ----
        xv = x_ref[...]                                   # (BT, L, C_in) f32
        xpad = _pad_len(xv, p1, p1)                       # (BT, L + 2*p1, C_in)
        a1 = jnp.concatenate([xpad[:, j:j + L, :] for j in range(k)], axis=-1)
        a1 = a1.reshape(BT * L, k * C_in)
        h = jnp.dot(a1.astype(jnp.bfloat16), w1_ref[...],     # bf16 operands, f32 accumulate
                    preferred_element_type=jnp.float32)       # (BT*L, C_out)
        h = h + bn[0:1, :]
        h = jnp.where(h >= 0, h, LEAKY_SLOPE * h)
        # dropout1: identity (eval mode)

        # ---- conv2 (stride ds) as one im2col matmul (ds-grouped reshape, no strided ref reads) ----
        hf = h.reshape(BT, L, C_out)
        hpad = _pad_len(hf, p2, Lp2r - L - p2)            # (BT, Lp2r, C_out)
        h3 = hpad.reshape(BT, Lg, ds, C_out)              # row q, slot r  <->  time ds*q + r
        a2 = jnp.concatenate(
            [h3[:, (j // ds):(j // ds) + L2, j % ds, :] for j in range(k)], axis=-1)
        a2 = a2.reshape(BT * L2, k * C_out)
        c2 = jnp.dot(a2.astype(jnp.bfloat16), w2_ref[...],
                     preferred_element_type=jnp.float32)      # (BT*L2, C_out)

        # ---- skip connection: MaxPool1d(ds, stride=ds) (if ds>1) then optional 1x1 conv ----
        if has_pool:
            y4 = y_ref[:, :L2 * ds, :].reshape(BT, L2, ds, C_in)
            ysk = y4[:, :, 0, :]
            for j in range(1, ds):
                ysk = jnp.maximum(ysk, y4[:, :, j, :])
        else:
            ysk = y_ref[...]                              # ds == 1  =>  L2 == L
        ysk = ysk.reshape(BT * L2, C_in)
        if has_1x1:
            ysk = jnp.dot(ysk.astype(jnp.bfloat16), wsk_ref[...],
                          preferred_element_type=jnp.float32)
        else:
            ysk = ysk.astype(jnp.float32)                 # C_in == C_out here

        # ---- residual add, outputs, BN2 + LeakyReLU ----
        pre = c2 + ysk                                    # pre-BN2 residual value (returned as y)
        yo_ref[...] = pre.reshape(BT, L2, C_out).astype(out_dtype)

        xb = pre * bn[1:2, :] + bn[2:3, :]
        xb = jnp.where(xb >= 0, xb, LEAKY_SLOPE * xb)
        xo_ref[...] = xb.reshape(BT, L2, C_out).astype(out_dtype)
        # dropout2: identity (eval mode)

    return kernel


def resblock1d_forward(x, y, params, *, downsample, kernel_size, batch_tile=8):
    """x, y: (N, C_in, L) float32, NCL layout (PyTorch Conv1d convention)."""
    N, C_in, L = x.shape
    C_out = params["w1"].shape[0]
    k, ds = kernel_size, downsample
    p1 = _padding(1, k)
    p2 = _padding(ds, k)
    L2 = (L + 2 * p2 - k) // ds + 1
    has_pool = ds > 1
    has_1x1 = "w_skip" in params
    if has_pool:
        assert (L - ds) // ds + 1 == L2, "skip/conv2 length mismatch (PyTorch add would fail too)"

    # rows of the ds-grouped conv2 input (covers all reads and the p2 halos)
    Lg = max(-(-(L + 2 * p2) // ds), (k - 1) // ds + L2)

    # NCL -> NLC (channels on lanes).
    # TODO(synk): keep the whole ResNet stack in NLC between blocks to drop these transposes.
    x_nlc = jnp.transpose(x, (0, 2, 1))
    y_nlc = jnp.transpose(y, (0, 2, 1))

    # batch blocking (several batch elements per grid step)
    BT = max(1, min(batch_tile, N))
    Np = -(-N // BT) * BT
    if Np != N:
        padb = ((0, Np - N), (0, 0), (0, 0))
        x_nlc = jnp.pad(x_nlc, padb)
        y_nlc = jnp.pad(y_nlc, padb)

    # torch Conv1d weight (C_out, C_in, k) -> im2col layout (k*C_in, C_out)
    def im2col_w(w):
        co, ci, kk = w.shape
        return jnp.transpose(w, (2, 1, 0)).reshape(kk * ci, co)

    # fold inference-mode BatchNorm; fold bn1 scale directly into conv1 weights
    s1 = params["bn1_gamma"] / jnp.sqrt(params["bn1_var"] + BN_EPS)
    b1 = params["bn1_beta"] - params["bn1_mean"] * s1
    s2 = params["bn2_gamma"] / jnp.sqrt(params["bn2_var"] + BN_EPS)
    b2 = params["bn2_beta"] - params["bn2_mean"] * s2

    w1 = (im2col_w(params["w1"]) * s1[None, :]).astype(jnp.bfloat16)
    w2 = im2col_w(params["w2"]).astype(jnp.bfloat16)
    bn = jnp.stack([b1, s2, b2], axis=0).astype(jnp.float32)          # (3, C_out)

    kernel = _make_kernel(BT, L, L2, C_in, C_out, k, ds, p1, p2, Lg,
                          has_pool, has_1x1, x.dtype)

    in_specs = [
        pl.BlockSpec((BT, L, C_in), lambda n: (n, 0, 0)),             # x
        pl.BlockSpec((BT, L, C_in), lambda n: (n, 0, 0)),             # y
        pl.BlockSpec((k * C_in, C_out), lambda n: (0, 0)),            # w1 (bn1-scaled, bf16)
        pl.BlockSpec((k * C_out, C_out), lambda n: (0, 0)),           # w2 (bf16)
    ]
    args = [x_nlc, y_nlc, w1, w2]
    if has_1x1:
        wsk = jnp.transpose(params["w_skip"][:, :, 0], (1, 0)).astype(jnp.bfloat16)
        in_specs.append(pl.BlockSpec((C_in, C_out), lambda n: (0, 0)))
        args.append(wsk)
    in_specs.append(pl.BlockSpec((3, C_out), lambda n: (0, 0)))       # merged BN params
    args.append(bn)

    grid_spec = pltpu.PrefetchScalarGridSpec(
        num_scalar_prefetch=0,
        grid=(Np // BT,),
        in_specs=in_specs,
        out_specs=(
            pl.BlockSpec((BT, L2, C_out), lambda n: (n, 0, 0)),       # x out
            pl.BlockSpec((BT, L2, C_out), lambda n: (n, 0, 0)),       # y out (pre-BN2 residual)
        ),
    )

    xo, yo = pl.pallas_call(
        kernel,
        out_shape=(jax.ShapeDtypeStruct((Np, L2, C_out), x.dtype),
                   jax.ShapeDtypeStruct((Np, L2, C_out), x.dtype)),
        grid_spec=grid_spec,
        compiler_params=pltpu.CompilerParams(
            dimension_semantics=("parallel",),        # batch tiles shard across TCs on v7x
            vmem_limit_bytes=32 * 1024 * 1024,        # explicit budget; safe on v5e/v6e/v7x
        ),
    )(*args)

    if Np != N:
        xo, yo = xo[:N], yo[:N]

    # back to NCL to match the PyTorch interface
    return jnp.transpose(xo, (0, 2, 1)), jnp.transpose(yo, (0, 2, 1))


def resblock1d_reference(x, y, params, *, downsample, kernel_size):
    """Pure-JAX reference (eval-mode BN / dropout), NCL layout."""
    k, ds = kernel_size, downsample
    p1, p2 = _padding(1, k), _padding(ds, k)
    dn = ("NCH", "OIH", "NCH")

    def bn(z, g, b, m, v):
        return (z - m[None, :, None]) / jnp.sqrt(v[None, :, None] + BN_EPS) \
            * g[None, :, None] + b[None, :, None]

    lrelu = lambda z: jnp.where(z >= 0, z, LEAKY_SLOPE * z)

    ys = y
    if ds > 1:
        N, C, L = ys.shape
        L2 = (L - ds) // ds + 1
        ys = ys[:, :, :L2 * ds].reshape(N, C, L2, ds).max(axis=-1)
    if "w_skip" in params:
        ys = jax.lax.conv_general_dilated(ys, params["w_skip"], (1,), [(0, 0)],
                                          dimension_numbers=dn)

    h = jax.lax.conv_general_dilated(x, params["w1"], (1,), [(p1, p1)],
                                     dimension_numbers=dn)
    h = lrelu(bn(h, params["bn1_gamma"], params["bn1_beta"],
                 params["bn1_mean"], params["bn1_var"]))
    h = jax.lax.conv_general_dilated(h, params["w2"], (ds,), [(p2, p2)],
                                     dimension_numbers=dn)
    h = h + ys
    y_out = h
    x_out = lrelu(bn(h, params["bn2_gamma"], params["bn2_beta"],
                     params["bn2_mean"], params["bn2_var"]))
    return x_out, y_out


if __name__ == "__main__":
    N, C_in, C_out, L = 2, 4, 8, 16
    kernel_size, downsample, dropout_rate = 3, 2, 0.1   # dropout inactive (eval mode)

    key = jax.random.PRNGKey(0)
    ks = jax.random.split(key, 12)
    params = {
        "w1": 0.3 * jax.random.normal(ks[0], (C_out, C_in, kernel_size), jnp.float32),
        "w2": 0.3 * jax.random.normal(ks[1], (C_out, C_out, kernel_size), jnp.float32),
        "w_skip": 0.3 * jax.random.normal(ks[2], (C_out, C_in, 1), jnp.float32),
        "bn1_gamma": 1.0 + 0.1 * jax.random.normal(ks[3], (C_out,), jnp.float32),
        "bn1_beta": 0.1 * jax.random.normal(ks[4], (C_out,), jnp.float32),
        "bn1_mean": 0.1 * jax.random.normal(ks[5], (C_out,), jnp.float32),
        "bn1_var": jax.nn.softplus(jax.random.normal(ks[6], (C_out,), jnp.float32)),
        "bn2_gamma": 1.0 + 0.1 * jax.random.normal(ks[7], (C_out,), jnp.float32),
        "bn2_beta": 0.1 * jax.random.normal(ks[8], (C_out,), jnp.float32),
        "bn2_mean": 0.1 * jax.random.normal(ks[9], (C_out,), jnp.float32),
        "bn2_var": jax.nn.softplus(jax.random.normal(ks[10], (C_out,), jnp.float32)),
    }
    x = jax.random.normal(ks[11], (N, C_in, L), jnp.float32)
    y = jax.random.normal(jax.random.fold_in(key, 99), (N, C_in, L), jnp.float32)

    xo, yo = resblock1d_forward(x, y, params,
                                downsample=downsample, kernel_size=kernel_size)
    jax.block_until_ready((xo, yo))

    xr, yr = resblock1d_reference(x, y, params,
                                  downsample=downsample, kernel_size=kernel_size)
    assert xo.shape == xr.shape and yo.shape == yr.shape
    # tolerance loosened vs the all-f32 version: MXU operands are bf16 (f32 accumulate)
    np.testing.assert_allclose(np.asarray(xo), np.asarray(xr), rtol=5e-2, atol=5e-2)
    np.testing.assert_allclose(np.asarray(yo), np.asarray(yr), rtol=5e-2, atol=5e-2)
    print("KERNEL_OK")
</pallas_src>

<mosaic_0001>
module attributes {stable_mosaic.version = 11 : i64} {
  func.func @kernel(%arg0: i32, %arg1: memref<2x16x4xf32, #tpu.memory_space<vmem>>, %arg2: memref<2x16x4xf32, #tpu.memory_space<vmem>>, %arg3: memref<12x8xbf16, #tpu.memory_space<vmem>>, %arg4: memref<24x8xbf16, #tpu.memory_space<vmem>>, %arg5: memref<4x8xbf16, #tpu.memory_space<vmem>>, %arg6: memref<3x8xf32, #tpu.memory_space<vmem>>, %arg7: memref<2x8x8xf32, #tpu.memory_space<vmem>>, %arg8: memref<2x8x8xf32, #tpu.memory_space<vmem>>) attributes {dimension_semantics = [#tpu.dimension_semantics<parallel>], iteration_bounds = array<i64: 1>, scalar_prefetch = 0 : i64, scratch_operands = 0 : i64, tpu.core_type = #tpu.core_type<tc>, window_params = [{transform_indices = @transform_0, window_bounds = array<i64: 2, 16, 4>}, {transform_indices = @transform_1, window_bounds = array<i64: 2, 16, 4>}, {pipeline_mode = #tpu.pipeline_mode<synchronous>, transform_indices = @transform_2, window_bounds = array<i64: 12, 8>}, {pipeline_mode = #tpu.pipeline_mode<synchronous>, transform_indices = @transform_3, window_bounds = array<i64: 24, 8>}, {pipeline_mode = #tpu.pipeline_mode<synchronous>, transform_indices = @transform_4, window_bounds = array<i64: 4, 8>}, {pipeline_mode = #tpu.pipeline_mode<synchronous>, transform_indices = @transform_5, window_bounds = array<i64: 3, 8>}, {transform_indices = @transform_6, window_bounds = array<i64: 2, 8, 8>}, {transform_indices = @transform_7, window_bounds = array<i64: 2, 8, 8>}]} {
    %c0 = arith.constant 0 : index
    %c0_0 = arith.constant 0 : index
    %0 = vector.load %arg6[%c0, %c0_0] : memref<3x8xf32, #tpu.memory_space<vmem>>, vector<3x8xf32>
    %c0_1 = arith.constant 0 : index
    %c0_2 = arith.constant 0 : index
    %c0_3 = arith.constant 0 : index
    %1 = vector.load %arg1[%c0_1, %c0_2, %c0_3] : memref<2x16x4xf32, #tpu.memory_space<vmem>>, vector<2x16x4xf32>
    %cst = arith.constant 0.000000e+00 : f32
    %2 = vector.broadcast %cst : f32 to vector<2x1x4xf32>
    %cst_4 = arith.constant 0.000000e+00 : f32
    %3 = vector.broadcast %cst_4 : f32 to vector<2x1x4xf32>
    %4 = tpu.concatenate %2, %1, %3 in 1 : vector<2x1x4xf32>, vector<2x16x4xf32>, vector<2x1x4xf32> -> vector<2x18x4xf32>
    %5 = vector.extract_strided_slice %4 {offsets = [0, 0, 0], sizes = [2, 16, 4], strides = [1, 1, 1]} : vector<2x18x4xf32> to vector<2x16x4xf32>
    %6 = vector.extract_strided_slice %4 {offsets = [0, 1, 0], sizes = [2, 16, 4], strides = [1, 1, 1]} : vector<2x18x4xf32> to vector<2x16x4xf32>
    %7 = vector.extract_strided_slice %4 {offsets = [0, 2, 0], sizes = [2, 16, 4], strides = [1, 1, 1]} : vector<2x18x4xf32> to vector<2x16x4xf32>
    %8 = tpu.concatenate %5, %6, %7 in 2 : vector<2x16x4xf32>, vector<2x16x4xf32>, vector<2x16x4xf32> -> vector<2x16x12xf32>
    %9 = vector.shape_cast %8 : vector<2x16x12xf32> to vector<32x12xf32>
    %10 = arith.truncf %9 : vector<32x12xf32> to vector<32x12xbf16>
    %c0_5 = arith.constant 0 : index
    %c0_6 = arith.constant 0 : index
    %11 = vector.load %arg3[%c0_5, %c0_6] : memref<12x8xbf16, #tpu.memory_space<vmem>>, vector<12x8xbf16>
    %cst_7 = arith.constant dense<0.000000e+00> : vector<32x8xf32>
    %12 = tpu.matmul %10, %11, %cst_7 {dimension_numbers = #tpu.dot_dimension_numbers<[1], [0], [0], [1], [0, 0, 1, 1], [], []>} : vector<32x12xbf16>, vector<12x8xbf16>, vector<32x8xf32> -> vector<32x8xf32>
    %13 = vector.extract_strided_slice %0 {offsets = [0, 0], sizes = [1, 8], strides = [1, 1]} : vector<3x8xf32> to vector<1x8xf32>
    %14 = vector.broadcast %13 : vector<1x8xf32> to vector<32x8xf32>
    %15 = arith.addf %12, %14 : vector<32x8xf32>
    %cst_8 = arith.constant 0.000000e+00 : f32
    %16 = vector.broadcast %cst_8 : f32 to vector<32x8xf32>
    %17 = arith.cmpf oge, %15, %16 : vector<32x8xf32>
    %cst_9 = arith.constant 0.00999999977 : f32
    %18 = vector.broadcast %cst_9 : f32 to vector<32x8xf32>
    %19 = arith.mulf %18, %15 : vector<32x8xf32>
    %20 = arith.select %17, %15, %19 : vector<32x8xi1>, vector<32x8xf32>
    %21 = vector.shape_cast %20 : vector<32x8xf32> to vector<2x16x8xf32>
    %cst_10 = arith.constant 0.000000e+00 : f32
    %22 = vector.broadcast %cst_10 : f32 to vector<2x1x8xf32>
    %cst_11 = arith.constant 0.000000e+00 : f32
    %23 = vector.broadcast %cst_11 : f32 to vector<2x1x8xf32>
    %24 = tpu.concatenate %22, %21, %23 in 1 : vector<2x1x8xf32>, vector<2x16x8xf32>, vector<2x1x8xf32> -> vector<2x18x8xf32>
    %25 = vector.shape_cast %24 : vector<2x18x8xf32> to vector<2x9x2x8xf32>
    %26 = vector.extract_strided_slice %25 {offsets = [0, 0, 0, 0], sizes = [2, 8, 1, 8], strides = [1, 1, 1, 1]} : vector<2x9x2x8xf32> to vector<2x8x1x8xf32>
    %27 = vector.shape_cast %26 : vector<2x8x1x8xf32> to vector<2x8x8xf32>
    %28 = vector.extract_strided_slice %25 {offsets = [0, 0, 1, 0], sizes = [2, 8, 1, 8], strides = [1, 1, 1, 1]} : vector<2x9x2x8xf32> to vector<2x8x1x8xf32>
    %29 = vector.shape_cast %28 : vector<2x8x1x8xf32> to vector<2x8x8xf32>
    %30 = vector.extract_strided_slice %25 {offsets = [0, 1, 0, 0], sizes = [2, 8, 1, 8], strides = [1, 1, 1, 1]} : vector<2x9x2x8xf32> to vector<2x8x1x8xf32>
    %31 = vector.shape_cast %30 : vector<2x8x1x8xf32> to vector<2x8x8xf32>
    %32 = tpu.concatenate %27, %29, %31 in 2 : vector<2x8x8xf32>, vector<2x8x8xf32>, vector<2x8x8xf32> -> vector<2x8x24xf32>
    %33 = vector.shape_cast %32 : vector<2x8x24xf32> to vector<16x24xf32>
    %34 = arith.truncf %33 : vector<16x24xf32> to vector<16x24xbf16>
    %c0_12 = arith.constant 0 : index
    %c0_13 = arith.constant 0 : index
    %35 = vector.load %arg4[%c0_12, %c0_13] : memref<24x8xbf16, #tpu.memory_space<vmem>>, vector<24x8xbf16>
    %cst_14 = arith.constant dense<0.000000e+00> : vector<16x8xf32>
    %36 = tpu.matmul %34, %35, %cst_14 {dimension_numbers = #tpu.dot_dimension_numbers<[1], [0], [0], [1], [0, 0, 1, 1], [], []>} : vector<16x24xbf16>, vector<24x8xbf16>, vector<16x8xf32> -> vector<16x8xf32>
    %c0_15 = arith.constant 0 : index
    %c0_16 = arith.constant 0 : index
    %c0_17 = arith.constant 0 : index
    %37 = vector.load %arg2[%c0_15, %c0_16, %c0_17] : memref<2x16x4xf32, #tpu.memory_space<vmem>>, vector<2x16x4xf32>
    %38 = vector.shape_cast %37 : vector<2x16x4xf32> to vector<2x8x2x4xf32>
    %39 = vector.extract_strided_slice %38 {offsets = [0, 0, 0, 0], sizes = [2, 8, 1, 4], strides = [1, 1, 1, 1]} : vector<2x8x2x4xf32> to vector<2x8x1x4xf32>
    %40 = vector.shape_cast %39 : vector<2x8x1x4xf32> to vector<2x8x4xf32>
    %41 = vector.extract_strided_slice %38 {offsets = [0, 0, 1, 0], sizes = [2, 8, 1, 4], strides = [1, 1, 1, 1]} : vector<2x8x2x4xf32> to vector<2x8x1x4xf32>
    %42 = vector.shape_cast %41 : vector<2x8x1x4xf32> to vector<2x8x4xf32>
    %43 = arith.maximumf %40, %42 : vector<2x8x4xf32>
    %44 = vector.shape_cast %43 : vector<2x8x4xf32> to vector<16x4xf32>
    %45 = arith.truncf %44 : vector<16x4xf32> to vector<16x4xbf16>
    %c0_18 = arith.constant 0 : index
    %c0_19 = arith.constant 0 : index
    %46 = vector.load %arg5[%c0_18, %c0_19] : memref<4x8xbf16, #tpu.memory_space<vmem>>, vector<4x8xbf16>
    %cst_20 = arith.constant dense<0.000000e+00> : vector<16x8xf32>
    %47 = tpu.matmul %45, %46, %cst_20 {dimension_numbers = #tpu.dot_dimension_numbers<[1], [0], [0], [1], [0, 0, 1, 1], [], []>} : vector<16x4xbf16>, vector<4x8xbf16>, vector<16x8xf32> -> vector<16x8xf32>
    %48 = arith.addf %36, %47 : vector<16x8xf32>
    %49 = vector.shape_cast %48 : vector<16x8xf32> to vector<2x8x8xf32>
    %c0_21 = arith.constant 0 : index
    %c0_22 = arith.constant 0 : index
    %c0_23 = arith.constant 0 : index
    %50 = vector.load %arg8[%c0_21, %c0_22, %c0_23] : memref<2x8x8xf32, #tpu.memory_space<vmem>>, vector<2x8x8xf32>
    tpu.vector_store %arg8[%c0_21, %c0_22, %c0_23], %49 {strides = array<i32>} : memref<2x8x8xf32, #tpu.memory_space<vmem>>, vector<2x8x8xf32>,
    %51 = vector.extract_strided_slice %0 {offsets = [1, 0], sizes = [1, 8], strides = [1, 1]} : vector<3x8xf32> to vector<1x8xf32>
    %52 = vector.broadcast %51 : vector<1x8xf32> to vector<16x8xf32>
    %53 = arith.mulf %48, %52 : vector<16x8xf32>
    %54 = vector.extract_strided_slice %0 {offsets = [2, 0], sizes = [1, 8], strides = [1, 1]} : vector<3x8xf32> to vector<1x8xf32>
    %55 = vector.broadcast %54 : vector<1x8xf32> to vector<16x8xf32>
    %56 = arith.addf %53, %55 : vector<16x8xf32>
    %cst_24 = arith.constant 0.000000e+00 : f32
    %57 = vector.broadcast %cst_24 : f32 to vector<16x8xf32>
    %58 = arith.cmpf oge, %56, %57 : vector<16x8xf32>
    %cst_25 = arith.constant 0.00999999977 : f32
    %59 = vector.broadcast %cst_25 : f32 to vector<16x8xf32>
    %60 = arith.mulf %59, %56 : vector<16x8xf32>
    %61 = arith.select %58, %56, %60 : vector<16x8xi1>, vector<16x8xf32>
    %62 = vector.shape_cast %61 : vector<16x8xf32> to vector<2x8x8xf32>
    %c0_26 = arith.constant 0 : index
    %c0_27 = arith.constant 0 : index
    %c0_28 = arith.constant 0 : index
    %63 = vector.load %arg7[%c0_26, %c0_27, %c0_28] : memref<2x8x8xf32, #tpu.memory_space<vmem>>, vector<2x8x8xf32>
    tpu.vector_store %arg7[%c0_26, %c0_27, %c0_28], %62 {strides = array<i32>} : memref<2x8x8xf32, #tpu.memory_space<vmem>>, vector<2x8x8xf32>,
    return
  }
  func.func @transform_0(%arg0: i32) -> (i32, i32, i32) {
    %c0_i32 = arith.constant 0 : i32
    %c0_i32_0 = arith.constant 0 : i32
    %c0_i32_1 = arith.constant 0 : i32
    return %arg0, %c0_i32, %c0_i32_0 : i32, i32, i32
  }
  func.func @transform_1(%arg0: i32) -> (i32, i32, i32) {
    %c0_i32 = arith.constant 0 : i32
    %c0_i32_0 = arith.constant 0 : i32
    %c0_i32_1 = arith.constant 0 : i32
    return %arg0, %c0_i32, %c0_i32_0 : i32, i32, i32
  }
  func.func @transform_2(%arg0: i32) -> (i32, i32) {
    %c0_i32 = arith.constant 0 : i32
    %c0_i32_0 = arith.constant 0 : i32
    %c0_i32_1 = arith.constant 0 : i32
    return %c0_i32, %c0_i32_0 : i32, i32
  }
  func.func @transform_3(%arg0: i32) -> (i32, i32) {
    %c0_i32 = arith.constant 0 : i32
    %c0_i32_0 = arith.constant 0 : i32
    %c0_i32_1 = arith.constant 0 : i32
    return %c0_i32, %c0_i32_0 : i32, i32
  }
  func.func @transform_4(%arg0: i32) -> (i32, i32) {
    %c0_i32 = arith.constant 0 : i32
    %c0_i32_0 = arith.constant 0 : i32
    %c0_i32_1 = arith.constant 0 : i32
    return %c0_i32, %c0_i32_0 : i32, i32
  }
  func.func @transform_5(%arg0: i32) -> (i32, i32) {
    %c0_i32 = arith.constant 0 : i32
    %c0_i32_0 = arith.constant 0 : i32
    %c0_i32_1 = arith.constant 0 : i32
    return %c0_i32, %c0_i32_0 : i32, i32
  }
  func.func @transform_6(%arg0: i32) -> (i32, i32, i32) {
    %c0_i32 = arith.constant 0 : i32
    %c0_i32_0 = arith.constant 0 : i32
    %c0_i32_1 = arith.constant 0 : i32
    return %arg0, %c0_i32, %c0_i32_0 : i32, i32, i32
  }
  func.func @transform_7(%arg0: i32) -> (i32, i32, i32) {
    %c0_i32 = arith.constant 0 : i32
    %c0_i32_0 = arith.constant 0 : i32
    %c0_i32_1 = arith.constant 0 : i32
    return %arg0, %c0_i32, %c0_i32_0 : i32, i32, i32
  }
}

</mosaic_0001>

<llo_original>
// kernel: tpu_custom_call.1
$region0: #{tpu_custom_call.1}
  #allocation0 [shape = 'u32[]', space=smem, size = 0x4, offset = 0x4, fixed_abs, tag = 'smem constant byte address 0x4 - core index']
  #allocation1 [shape = 'u32[144,128]{1,0:T(1,128)}', space=vmem, size = 0x12000, scoped, tag = 'internal scratch']
  %s0 = inlined_call_operand.vmem [shape: f32[2,16,4], index: 0, kind: input, shape index: {}]
  %s1 = inlined_call_operand.vmem [shape: f32[2,16,4], index: 1, kind: input, shape index: {}]
  %s2 = inlined_call_operand.vmem [shape: bf16[12,8], index: 2, kind: input, shape index: {}]
  %s3 = inlined_call_operand.vmem [shape: bf16[24,8], index: 3, kind: input, shape index: {}]
  %s4 = inlined_call_operand.vmem [shape: bf16[4,8], index: 4, kind: input, shape index: {}]
  %s5 = inlined_call_operand.vmem [shape: f32[3,8], index: 5, kind: input, shape index: {}]
  %s6 = inlined_call_operand.hbm [shape: f32[2,8,8], index: 6, kind: output, shape index: {0}]
  %s7 = inlined_call_operand.hbm [shape: f32[2,8,8], index: 7, kind: output, shape index: {1}]
  %8 = xla_tuple %s6, %s7
  %s9 = sld [smem:[#allocation0]]
  $region42: #{tpu_custom_call.1} parent=0
    _
  %s11 = ssub.s32 1, %s9
  %s12 = scalar_select 0, %s11, %s9
  $region1: #{tpu_custom_call.1} parent=0
    #allocation2 [shape = 'u8[8192]{0}', space=vmem, size = 0x2000, scoped, tag = 'output window, operand 0, single buffered']
    #allocation3 [shape = 's32[1]{0}', space=sflag, size = 0x4, scoped, tag = 'scoped memory for tpu_custom_call.1']
    #allocation4 [shape = 'u8[8192]{0}', space=vmem, size = 0x2000, scoped, tag = 'output window, operand 1, single buffered']
    #allocation5 [shape = 's32[1]{0}', space=sflag, size = 0x4, scoped, tag = 'scoped memory for tpu_custom_call.1']
    %13 = vsyncpa [#allocation3], 0
    %14 = vsyncpa [#allocation5], 0
    // Predicated region
    $region2: #{tpu_custom_call.1} parent=1 // pred_check
      _
    $region3: #{tpu_custom_call.1} parent=1 // pred_check_branch
      %16 = sbr.rel (0) target = $region5
    $region4: #{tpu_custom_call.1} parent=1 // pred_region
      _
    $region5: #{tpu_custom_call.1} parent=1 // pred_fallthru
      _
    // Predicated region
    $region6: #{tpu_custom_call.1} parent=1 // pred_check
      _
    $region7: #{tpu_custom_call.1} parent=1 // pred_check_branch
      %18 = sbr.rel (0) target = $region9
    $region8: #{tpu_custom_call.1} parent=1 // pred_region
      _
    $region9: #{tpu_custom_call.1} parent=1 // pred_fallthru
      _
    // Predicated region
    $region10: #{tpu_custom_call.1} parent=1 // pred_check
      _
    $region11: #{tpu_custom_call.1} parent=1 // pred_check_branch
      %20 = sbr.rel (0) target = $region13
    $region12: #{tpu_custom_call.1} parent=1 // pred_region
      _
    $region13: #{tpu_custom_call.1} parent=1 // pred_fallthru
      _
    // Predicated region
    $region14: #{tpu_custom_call.1} parent=1 // pred_check
      _
    $region15: #{tpu_custom_call.1} parent=1 // pred_check_branch
      %22 = sbr.rel (0) target = $region17
    $region16: #{tpu_custom_call.1} parent=1 // pred_region
      _
    $region17: #{tpu_custom_call.1} parent=1 // pred_fallthru
      _
    // Predicated region
    $region18: #{tpu_custom_call.1} parent=1 // pred_check
      _
    $region19: #{tpu_custom_call.1} parent=1 // pred_check_branch
      %24 = sbr.rel (0) target = $region21
    $region20: #{tpu_custom_call.1} parent=1 // pred_region
      _
    $region21: #{tpu_custom_call.1} parent=1 // pred_fallthru
      _
    // Predicated region
    $region22: #{tpu_custom_call.1} parent=1 // pred_check
      _
    $region23: #{tpu_custom_call.1} parent=1 // pred_check_branch
      %26 = sbr.rel (0) target = $region25
    $region24: #{tpu_custom_call.1} parent=1 // pred_region
      _
    $region25: #{tpu_custom_call.1} parent=1 // pred_fallthru
      _
    %v28 = vld [vmem:[%s5] sm:$0x7]
    %v29 = vld [vmem:[%s0] sm:$0xff]
    %v30 = vld [vmem:[%s0 + $0x8] sm:$0xff]
    %v31 = vld [vmem:[%s0 + $0x10] sm:$0xff]
    %v32 = vld [vmem:[%s0 + $0x18] sm:$0xff]
    %vm37 = vcmask 1040384
    %v38 = vrot.slane %v29, 7
    %v39 = vrot.slane %v30, 7
    %v40 = vsel %vm37, %v38, %v39
    %v41 = vrot.slane %v31, 7
    %v42 = vrot.slane %v32, 7
    %v43 = vsel %vm37, %v41, %v42
    %v50 = vsel %vm37, 0.0, %v38
    %v51 = vsel %vm37, 0.0, %v41
    %v52 = vsel %vm37, %v39, 0.0
    %v53 = vsel %vm37, %v42, 0.0
    %vm58 = vcmask 1046528
    %v59 = vrot.slane %v50, 1
    %v60 = vrot.slane %v40, 1
    %v61 = vsel %vm58, %v59, %v60
    %v62 = vrot.slane %v52, 1
    %v63 = vsel %vm58, %v60, %v62
    %v64 = vrot.slane %v51, 1
    %v65 = vrot.slane %v43, 1
    %v66 = vsel %vm58, %v64, %v65
    %v67 = vrot.slane %v53, 1
    %v68 = vsel %vm58, %v65, %v67
    %69 = vrot.lane.b32.xlu0 %v61, 4
    %v70 = vpop.permute.xlu0 %69
    %71 = vrot.lane.b32.xlu0 %v63, 4
    %v72 = vpop.permute.xlu0 %71
    %73 = vrot.lane.b32.xlu0 %v66, 4
    %v74 = vpop.permute.xlu0 %73
    %75 = vrot.lane.b32.xlu0 %v68, 4
    %v76 = vpop.permute.xlu0 %75
    %vm81 = vcmask 1045504
    %v82 = vrot.slane %v50, 2
    %v83 = vrot.slane %v40, 2
    %v84 = vsel %vm81, %v82, %v83
    %v85 = vrot.slane %v52, 2
    %v86 = vsel %vm81, %v83, %v85
    %v87 = vrot.slane %v51, 2
    %v88 = vrot.slane %v43, 2
    %v89 = vsel %vm81, %v87, %v88
    %v90 = vrot.slane %v53, 2
    %v91 = vsel %vm81, %v88, %v90
    %92 = vrot.lane.b32.xlu0 %v84, 8
    %v93 = vpop.permute.xlu0 %92
    %94 = vrot.lane.b32.xlu0 %v86, 8
    %v95 = vpop.permute.xlu0 %94
    %96 = vrot.lane.b32.xlu0 %v89, 8
    %v97 = vpop.permute.xlu0 %96
    %98 = vrot.lane.b32.xlu0 %v91, 8
    %v99 = vpop.permute.xlu0 %98
    %vm104 = vcmask 31744
    %v105 = vsel %vm104, %v50, %v70
    %v106 = vsel %vm104, %v40, %v72
    %v107 = vsel %vm104, %v51, %v74
    %v108 = vsel %vm104, %v43, %v76
    %vm109 = vcmask 64512
    %v110 = vsel %vm109, %v105, %v93
    %v111 = vsel %vm109, %v106, %v95
    %v112 = vsel %vm109, %v107, %v97
    %v113 = vsel %vm109, %v108, %v99
    %v114 = vpack.c.bf16 %v111, %v110
    %v115 = vpack.c.bf16 %v113, %v112
    %v116 = vld [vmem:[%s2] sm:$0xf]
    %v117 = vld [vmem:[%s2 + $0x4] sm:$0x3]
    %v118 = vlaneseq
    %v119 = vshrl.u32 %v118, 7
    %v120 = vsub.s32 0, %v119
    %v121 = vrot.slane %v28, %v120
    %v124 = vunpack.c.l.b16 %v116
    %v125 = vunpack.c.l.b16 %v117
    %v126 = vpack.c.b16 %v125, %v124
    %vm127 = vcmask 97280
    %v129 = vsel %vm127, %v114, 0
    %v132 = vsel %vm127, %v115, 0
    %v135 = vsel %vm81, %v126, 0
    %137 = vmatprep.subr.bf16.mxu0 0
    %138 = vmatpush1.bf16.msra.mxu0 %v135
    %139 = vmatprep.subr.bf16.mxu0 0
    %140 = vmatpush1.bf16.msra.mxu0 0
    %141 = vmatprep.subr.bf16.mxu0 0
    %142 = vmatpush1.bf16.msra.mxu0 0
    %143 = vmatprep.subr.bf16.mxu0 0
    %144 = vmatpush1.bf16.msra.mxu0 0
    %145 = vmatprep.subr.bf16.mxu0 0
    %146 = vmatpush1.bf16.msra.mxu0 0
    %147 = vmatprep.subr.bf16.mxu0 0
    %148 = vmatpush1.bf16.msra.mxu0 0
    %149 = vmatprep.subr.bf16.mxu0 0
    %150 = vmatpush1.bf16.msra.mxu0 0
    %151 = vmatprep.subr.bf16.mxu0 0
    %152 = vmatpush1.bf16.msra.mxu0 0
    %153 = vmatprep.subr.bf16.mxu0 0
    %154 = vmatpush1.bf16.msra.mxu0 0
    %155 = vmatprep.subr.bf16.mxu0 0
    %156 = vmatpush1.bf16.msra.mxu0 0
    %157 = vmatprep.subr.bf16.mxu0 0
    %158 = vmatpush1.bf16.msra.mxu0 0
    %159 = vmatprep.subr.bf16.mxu0 0
    %160 = vmatpush1.bf16.msra.mxu0 0
    %161 = vmatprep.subr.bf16.mxu0 0
    %162 = vmatpush1.bf16.msra.mxu0 0
    %163 = vmatprep.subr.bf16.mxu0 0
    %164 = vmatpush1.bf16.msra.mxu0 0
    %165 = vmatprep.subr.bf16.mxu0 0
    %166 = vmatpush1.bf16.msra.mxu0 0
    %167 = vmatprep.subr.bf16.mxu0 0
    %168 = vmatpush1.bf16.msra.mxu0 0
    %169 = vmatprep.mubr.bf16.mxu0 0
    %170 = vmatmul.mubr.bf16.gmra.mrb[0].mxu0 %v129
    %v171 = vpop.f32.mrb[0].mxu0
    %v172 = vadd.f32 %v121, %v171
    %v173 = vpop.f32.mrb[0].mxu0
    %v174 = vpop.f32.mrb[0].mxu0
    %v175 = vadd.f32 %v121, %v174
    %v176 = vpop.f32.mrb[0].mxu0
    %177 = vmatprep.mubr.bf16.mxu0 0
    %178 = vmatmul.mubr.bf16.gmra.mrb[0].mxu0 %v132
    %v179 = vpop.f32.mrb[0].mxu0
    %v180 = vadd.f32 %v121, %v179
    %v181 = vpop.f32.mrb[0].mxu0
    %v182 = vpop.f32.mrb[0].mxu0
    %v183 = vadd.f32 %v121, %v182
    %v184 = vpop.f32.mrb[0].mxu0
    %185 = vdwg.mxu0
    %vm186 = vcmp.ge.f32.partialorder %v172, 0.0
    %vm187 = vcmp.ge.f32.partialorder %v175, 0.0
    %vm188 = vcmp.ge.f32.partialorder %v180, 0.0
    %vm189 = vcmp.ge.f32.partialorder %v183, 0.0
    %v190 = vmul.f32 %v172, 0.01
    %v191 = vmul.f32 %v175, 0.01
    %v192 = vmul.f32 %v180, 0.01
    %v193 = vmul.f32 %v183, 0.01
    %v194 = vsel %vm186, %v172, %v190
    %v195 = vsel %vm187, %v175, %v191
    %v196 = vsel %vm188, %v180, %v192
    %v197 = vsel %vm189, %v183, %v193
    %v202 = vrot.slane %v194, 7
    %v203 = vrot.slane %v195, 7
    %v204 = vsel %vm37, %v202, %v203
    %v205 = vrot.slane %v196, 7
    %v206 = vrot.slane %v197, 7
    %v207 = vsel %vm37, %v205, %v206
    %v212 = vsel %vm37, 0.0, %v202
    %v213 = vsel %vm37, 0.0, %v205
    %v214 = vsel %vm37, %v203, 0.0
    %v215 = vsel %vm37, %v206, 0.0
    %v220 = vcombine.high %v212, %v212
    %v222 = vunpack.c.l.s4 1983009808
    %v223 = vunpack.c.0.s8 %v222
    %v224 = vlaneseq
    %v225 = vshrl.u32 %v224, 7
    %v226 = vsub.s32 %v223, %v225
    %v227 = vrot.slane %v212, %v226
    %v229 = vunpack.c.l.s4 1983009808
    %v230 = vunpack.c.0.s8 %v229
    %v231 = vlaneseq
    %v232 = vshrl.u32 %v231, 7
    %v233 = vsub.s32 %v230, %v232
    %v234 = vrot.slane %v220, %v233
    %v235 = vcombine.high %v227, %v227
    %v236 = vcombine.high %v234, %v234
    %v237 = vcombine.high %v204, %v204
    %v239 = vunpack.c.l.s4 1983009808
    %v240 = vunpack.c.0.s8 %v239
    %v241 = vlaneseq
    %v242 = vshrl.u32 %v241, 7
    %v243 = vsub.s32 %v240, %v242
    %v244 = vrot.slane %v204, %v243
    %v246 = vunpack.c.l.s4 1983009808
    %v247 = vunpack.c.0.s8 %v246
    %v248 = vlaneseq
    %v249 = vshrl.u32 %v248, 7
    %v250 = vsub.s32 %v247, %v249
    %v251 = vrot.slane %v237, %v250
    %v252 = vcombine.high %v244, %v244
    %v253 = vcombine.high %v251, %v251
    %v255 = vunpack.c.l.s4 1983009808
    %v256 = vunpack.c.0.s8 %v255
    %v257 = vlaneseq
    %v258 = vshrl.u32 %v257, 7
    %v259 = vsub.s32 %v256, %v258
    %v260 = vrot.slane %v214, %v259
    %v261 = vcombine.high %v213, %v213
    %v263 = vunpack.c.l.s4 1983009808
    %v264 = vunpack.c.0.s8 %v263
    %v265 = vlaneseq
    %v266 = vshrl.u32 %v265, 7
    %v267 = vsub.s32 %v264, %v266
    %v268 = vrot.slane %v213, %v267
    %v270 = vunpack.c.l.s4 1983009808
    %v271 = vunpack.c.0.s8 %v270
    %v272 = vlaneseq
    %v273 = vshrl.u32 %v272, 7
    %v274 = vsub.s32 %v271, %v273
    %v275 = vrot.slane %v261, %v274
    %v276 = vcombine.high %v268, %v268
    %v277 = vcombine.high %v275, %v275
    %v278 = vcombine.high %v207, %v207
    %v280 = vunpack.c.l.s4 1983009808
    %v281 = vunpack.c.0.s8 %v280
    %v282 = vlaneseq
    %v283 = vshrl.u32 %v282, 7
    %v284 = vsub.s32 %v281, %v283
    %v285 = vrot.slane %v207, %v284
    %v287 = vunpack.c.l.s4 1983009808
    %v288 = vunpack.c.0.s8 %v287
    %v289 = vlaneseq
    %v290 = vshrl.u32 %v289, 7
    %v291 = vsub.s32 %v288, %v290
    %v292 = vrot.slane %v278, %v291
    %v293 = vcombine.high %v285, %v285
    %v294 = vcombine.high %v292, %v292
    %v296 = vunpack.c.l.s4 1983009808
    %v297 = vunpack.c.0.s8 %v296
    %v298 = vlaneseq
    %v299 = vshrl.u32 %v298, 7
    %v300 = vsub.s32 %v297, %v299
    %v301 = vrot.slane %v215, %v300
    %v302 = vlaneseq
    %v303 = vshrl.u32 %v302, 7
    %v304 = vsub.s32 0, %v303
    %v305 = vrot.slane %v227, %v304
    %v306 = vlaneseq
    %v307 = vshrl.u32 %v306, 7
    %v308 = vsub.s32 0, %v307
    %v309 = vrot.slane %v235, %v308
    %v310 = vlaneseq
    %v311 = vshrl.u32 %v310, 7
    %v312 = vsub.s32 0, %v311
    %v313 = vrot.slane %v234, %v312
    %v314 = vlaneseq
    %v315 = vshrl.u32 %v314, 7
    %v316 = vsub.s32 0, %v315
    %v317 = vrot.slane %v236, %v316
    %v318 = vlaneseq
    %v319 = vshrl.u32 %v318, 7
    %v320 = vsub.s32 0, %v319
    %v321 = vrot.slane %v244, %v320
    %v322 = vlaneseq
    %v323 = vshrl.u32 %v322, 7
    %v324 = vsub.s32 0, %v323
    %v325 = vrot.slane %v252, %v324
    %v326 = vlaneseq
    %v327 = vshrl.u32 %v326, 7
    %v328 = vsub.s32 0, %v327
    %v329 = vrot.slane %v251, %v328
    %v330 = vlaneseq
    %v331 = vshrl.u32 %v330, 7
    %v332 = vsub.s32 0, %v331
    %v333 = vrot.slane %v253, %v332
    %v334 = vlaneseq
    %v335 = vshrl.u32 %v334, 7
    %v336 = vsub.s32 0, %v335
    %v337 = vrot.slane %v268, %v336
    %v338 = vlaneseq
    %v339 = vshrl.u32 %v338, 7
    %v340 = vsub.s32 0, %v339
    %v341 = vrot.slane %v276, %v340
    %v342 = vlaneseq
    %v343 = vshrl.u32 %v342, 7
    %v344 = vsub.s32 0, %v343
    %v345 = vrot.slane %v275, %v344
    %v346 = vlaneseq
    %v347 = vshrl.u32 %v346, 7
    %v348 = vsub.s32 0, %v347
    %v349 = vrot.slane %v277, %v348
    %v350 = vlaneseq
    %v351 = vshrl.u32 %v350, 7
    %v352 = vsub.s32 0, %v351
    %v353 = vrot.slane %v285, %v352
    %v354 = vlaneseq
    %v355 = vshrl.u32 %v354, 7
    %v356 = vsub.s32 0, %v355
    %v357 = vrot.slane %v293, %v356
    %v358 = vlaneseq
    %v359 = vshrl.u32 %v358, 7
    %v360 = vsub.s32 0, %v359
    %v361 = vrot.slane %v292, %v360
    %v362 = vlaneseq
    %v363 = vshrl.u32 %v362, 7
    %v364 = vsub.s32 0, %v363
    %v365 = vrot.slane %v294, %v364
    %vm366 = vcmask 1041409
    %v367 = vsel %vm366, %v309, %v305
    %vm368 = vcmask 1042434
    %v369 = vsel %vm368, %v313, %v367
    %vm370 = vcmask 1043459
    %v371 = vsel %vm370, %v317, %v369
    %vm372 = vcmask 1044484
    %v373 = vsel %vm372, %v321, %v371
    %vm374 = vcmask 1045509
    %v375 = vsel %vm374, %v325, %v373
    %vm376 = vcmask 1046534
    %v377 = vsel %vm376, %v329, %v375
    %vm378 = vcmask 1047559
    %v379 = vsel %vm378, %v333, %v377
    %v380 = vsel %vm366, %v341, %v337
    %v381 = vsel %vm368, %v345, %v380
    %v382 = vsel %vm370, %v349, %v381
    %v383 = vsel %vm372, %v353, %v382
    %v384 = vsel %vm374, %v357, %v383
    %v385 = vsel %vm376, %v361, %v384
    %v386 = vsel %vm378, %v365, %v385
    %v389 = vlaneseq
    %v390 = vshrl.u32 %v389, 7
    %v391 = vsub.s32 1, %v390
    %v392 = vrot.slane %v227, %v391
    %v393 = vlaneseq
    %v394 = vshrl.u32 %v393, 7
    %v395 = vsub.s32 1, %v394
    %v396 = vrot.slane %v235, %v395
    %v397 = vlaneseq
    %v398 = vshrl.u32 %v397, 7
    %v399 = vsub.s32 1, %v398
    %v400 = vrot.slane %v234, %v399
    %v401 = vlaneseq
    %v402 = vshrl.u32 %v401, 7
    %v403 = vsub.s32 1, %v402
    %v404 = vrot.slane %v236, %v403
    %v405 = vlaneseq
    %v406 = vshrl.u32 %v405, 7
    %v407 = vsub.s32 1, %v406
    %v408 = vrot.slane %v244, %v407
    %v409 = vlaneseq
    %v410 = vshrl.u32 %v409, 7
    %v411 = vsub.s32 1, %v410
    %v412 = vrot.slane %v252, %v411
    %v413 = vlaneseq
    %v414 = vshrl.u32 %v413, 7
    %v415 = vsub.s32 1, %v414
    %v416 = vrot.slane %v251, %v415
    %v417 = vlaneseq
    %v418 = vshrl.u32 %v417, 7
    %v419 = vsub.s32 1, %v418
    %v420 = vrot.slane %v253, %v419
    %v421 = vlaneseq
    %v422 = vshrl.u32 %v421, 7
    %v423 = vsub.s32 1, %v422
    %v424 = vrot.slane %v268, %v423
    %v425 = vlaneseq
    %v426 = vshrl.u32 %v425, 7
    %v427 = vsub.s32 1, %v426
    %v428 = vrot.slane %v276, %v427
    %v429 = vlaneseq
    %v430 = vshrl.u32 %v429, 7
    %v431 = vsub.s32 1, %v430
    %v432 = vrot.slane %v275, %v431
    %v433 = vlaneseq
    %v434 = vshrl.u32 %v433, 7
    %v435 = vsub.s32 1, %v434
    %v436 = vrot.slane %v277, %v435
    %v437 = vlaneseq
    %v438 = vshrl.u32 %v437, 7
    %v439 = vsub.s32 1, %v438
    %v440 = vrot.slane %v285, %v439
    %v441 = vlaneseq
    %v442 = vshrl.u32 %v441, 7
    %v443 = vsub.s32 1, %v442
    %v444 = vrot.slane %v293, %v443
    %v445 = vlaneseq
    %v446 = vshrl.u32 %v445, 7
    %v447 = vsub.s32 1, %v446
    %v448 = vrot.slane %v292, %v447
    %v449 = vlaneseq
    %v450 = vshrl.u32 %v449, 7
    %v451 = vsub.s32 1, %v450
    %v452 = vrot.slane %v294, %v451
    %v453 = vsel %vm366, %v396, %v392
    %v454 = vsel %vm368, %v400, %v453
    %v455 = vsel %vm370, %v404, %v454
    %v456 = vsel %vm372, %v408, %v455
    %v457 = vsel %vm374, %v412, %v456
    %v458 = vsel %vm376, %v416, %v457
    %v459 = vsel %vm378, %v420, %v458
    %v460 = vsel %vm366, %v428, %v424
    %v461 = vsel %vm368, %v432, %v460
    %v462 = vsel %vm370, %v436, %v461
    %v463 = vsel %vm372, %v440, %v462
    %v464 = vsel %vm374, %v444, %v463
    %v465 = vsel %vm376, %v448, %v464
    %v466 = vsel %vm378, %v452, %v465
    %467 = vrot.lane.b32.xlu0 %v459, 8
    %v468 = vpop.permute.xlu0 %467
    %469 = vrot.lane.b32.xlu0 %v466, 8
    %v470 = vpop.permute.xlu0 %469
    %v473 = vlaneseq
    %v474 = vshrl.u32 %v473, 7
    %v475 = vsub.s32 0, %v474
    %v476 = vrot.slane %v260, %v475
    %v477 = vlaneseq
    %v478 = vshrl.u32 %v477, 7
    %v479 = vsub.s32 0, %v478
    %v480 = vrot.slane %v301, %v479
    %v481 = vsel %vm366, %v313, %v309
    %v482 = vsel %vm368, %v317, %v481
    %v483 = vsel %vm370, %v321, %v482
    %v484 = vsel %vm372, %v325, %v483
    %v485 = vsel %vm374, %v329, %v484
    %v486 = vsel %vm376, %v333, %v485
    %v487 = vsel %vm378, %v476, %v486
    %v488 = vsel %vm366, %v345, %v341
    %v489 = vsel %vm368, %v349, %v488
    %v490 = vsel %vm370, %v353, %v489
    %v491 = vsel %vm372, %v357, %v490
    %v492 = vsel %vm374, %v361, %v491
    %v493 = vsel %vm376, %v365, %v492
    %v494 = vsel %vm378, %v480, %v493
    %495 = vrot.lane.b32.xlu0 %v487, 16
    %v496 = vpop.permute.xlu0 %495
    %497 = vrot.lane.b32.xlu0 %v494, 16
    %v498 = vpop.permute.xlu0 %497
    %v501 = vsel %vm109, %v379, %v468
    %v502 = vsel %vm109, %v386, %v470
    %vm503 = vcmask 130048
    %v504 = vsel %vm503, %v501, %v496
    %v505 = vsel %vm503, %v502, %v498
    %v506 = vpack.c.bf16 %v505, %v504
    %v507 = vld [vmem:[%s3] sm:$0xf]
    %v508 = vld [vmem:[%s3 + $0x4] sm:$0xf]
    %v509 = vld [vmem:[%s3 + $0x8] sm:$0xf]
    %v510 = vld [vmem:[%s1] sm:$0xff]
    %v511 = vld [vmem:[%s1 + $0x8] sm:$0xff]
    %v512 = vld [vmem:[%s1 + $0x10] sm:$0xff]
    %v513 = vld [vmem:[%s1 + $0x18] sm:$0xff]
    %v518 = vcombine.high %v510, %v510
    %v520 = vunpack.c.l.s4 1983009808
    %v521 = vunpack.c.0.s8 %v520
    %v522 = vlaneseq
    %v523 = vshrl.u32 %v522, 7
    %v524 = vsub.s32 %v521, %v523
    %v525 = vrot.slane %v510, %v524
    %v527 = vunpack.c.l.s4 1983009808
    %v528 = vunpack.c.0.s8 %v527
    %v529 = vlaneseq
    %v530 = vshrl.u32 %v529, 7
    %v531 = vsub.s32 %v528, %v530
    %v532 = vrot.slane %v518, %v531
    %v533 = vcombine.high %v525, %v525
    %v534 = vcombine.high %v532, %v532
    %v535 = vcombine.high %v511, %v511
    %v537 = vunpack.c.l.s4 1983009808
    %v538 = vunpack.c.0.s8 %v537
    %v539 = vlaneseq
    %v540 = vshrl.u32 %v539, 7
    %v541 = vsub.s32 %v538, %v540
    %v542 = vrot.slane %v511, %v541
    %v544 = vunpack.c.l.s4 1983009808
    %v545 = vunpack.c.0.s8 %v544
    %v546 = vlaneseq
    %v547 = vshrl.u32 %v546, 7
    %v548 = vsub.s32 %v545, %v547
    %v549 = vrot.slane %v535, %v548
    %v550 = vcombine.high %v542, %v542
    %v551 = vcombine.high %v549, %v549
    %v552 = vcombine.high %v512, %v512
    %v554 = vunpack.c.l.s4 1983009808
    %v555 = vunpack.c.0.s8 %v554
    %v556 = vlaneseq
    %v557 = vshrl.u32 %v556, 7
    %v558 = vsub.s32 %v555, %v557
    %v559 = vrot.slane %v512, %v558
    %v561 = vunpack.c.l.s4 1983009808
    %v562 = vunpack.c.0.s8 %v561
    %v563 = vlaneseq
    %v564 = vshrl.u32 %v563, 7
    %v565 = vsub.s32 %v562, %v564
    %v566 = vrot.slane %v552, %v565
    %v567 = vcombine.high %v559, %v559
    %v568 = vcombine.high %v566, %v566
    %v569 = vcombine.high %v513, %v513
    %v571 = vunpack.c.l.s4 1983009808
    %v572 = vunpack.c.0.s8 %v571
    %v573 = vlaneseq
    %v574 = vshrl.u32 %v573, 7
    %v575 = vsub.s32 %v572, %v574
    %v576 = vrot.slane %v513, %v575
    %v578 = vunpack.c.l.s4 1983009808
    %v579 = vunpack.c.0.s8 %v578
    %v580 = vlaneseq
    %v581 = vshrl.u32 %v580, 7
    %v582 = vsub.s32 %v579, %v581
    %v583 = vrot.slane %v569, %v582
    %v584 = vcombine.high %v576, %v576
    %v585 = vcombine.high %v583, %v583
    %v602 = vrot.slane %v525, 7
    %v603 = vrot.slane %v602, 2
    %v604 = vrot.slane %v533, 7
    %v605 = vrot.slane %v604, 2
    %v606 = vrot.slane %v532, 7
    %v607 = vrot.slane %v606, 2
    %v608 = vrot.slane %v534, 7
    %v609 = vrot.slane %v608, 2
    %v610 = vrot.slane %v542, 7
    %v611 = vrot.slane %v610, 2
    %v612 = vrot.slane %v550, 7
    %v613 = vrot.slane %v612, 2
    %v614 = vrot.slane %v549, 7
    %v615 = vrot.slane %v614, 2
    %v616 = vrot.slane %v551, 7
    %v617 = vrot.slane %v616, 2
    %v618 = vrot.slane %v559, 7
    %v619 = vrot.slane %v618, 2
    %v620 = vrot.slane %v567, 7
    %v621 = vrot.slane %v620, 2
    %v622 = vrot.slane %v566, 7
    %v623 = vrot.slane %v622, 2
    %v624 = vrot.slane %v568, 7
    %v625 = vrot.slane %v624, 2
    %v626 = vrot.slane %v576, 7
    %v627 = vrot.slane %v626, 2
    %v628 = vrot.slane %v584, 7
    %v629 = vrot.slane %v628, 2
    %v630 = vrot.slane %v583, 7
    %v631 = vrot.slane %v630, 2
    %v632 = vrot.slane %v585, 7
    %v633 = vrot.slane %v632, 2
    %v650 = vmax.f32 %v525, %v603
    %v651 = vmax.f32 %v533, %v605
    %v652 = vmax.f32 %v532, %v607
    %v653 = vmax.f32 %v534, %v609
    %v654 = vmax.f32 %v542, %v611
    %v655 = vmax.f32 %v550, %v613
    %v656 = vmax.f32 %v549, %v615
    %v657 = vmax.f32 %v551, %v617
    %v658 = vmax.f32 %v559, %v619
    %v659 = vmax.f32 %v567, %v621
    %v660 = vmax.f32 %v566, %v623
    %v661 = vmax.f32 %v568, %v625
    %v662 = vmax.f32 %v576, %v627
    %v663 = vmax.f32 %v584, %v629
    %v664 = vmax.f32 %v583, %v631
    %v665 = vmax.f32 %v585, %v633
    %v666 = vpack.c.bf16 %v650, %v650
    %v667 = vpack.c.bf16 %v651, %v651
    %v668 = vpack.c.bf16 %v652, %v652
    %v669 = vpack.c.bf16 %v653, %v653
    %v670 = vpack.c.bf16 %v654, %v654
    %v671 = vpack.c.bf16 %v655, %v655
    %v672 = vpack.c.bf16 %v656, %v656
    %v673 = vpack.c.bf16 %v657, %v657
    %v674 = vpack.c.bf16 %v658, %v658
    %v675 = vpack.c.bf16 %v659, %v659
    %v676 = vpack.c.bf16 %v660, %v660
    %v677 = vpack.c.bf16 %v661, %v661
    %v678 = vpack.c.bf16 %v662, %v662
    %v679 = vpack.c.bf16 %v663, %v663
    %v680 = vpack.c.bf16 %v664, %v664
    %v681 = vpack.c.bf16 %v665, %v665
    %v682 = vld [vmem:[%s4] sm:$0x3]
    %v699 = vunpack.c.l.b16 %v666
    %v700 = vunpack.c.l.b16 %v667
    %v701 = vunpack.c.l.b16 %v668
    %v702 = vunpack.c.l.b16 %v669
    %v703 = vunpack.c.l.b16 %v670
    %v704 = vunpack.c.l.b16 %v671
    %v705 = vunpack.c.l.b16 %v672
    %v706 = vunpack.c.l.b16 %v673
    %v707 = vunpack.c.l.b16 %v674
    %v708 = vunpack.c.l.b16 %v675
    %v709 = vunpack.c.l.b16 %v676
    %v710 = vunpack.c.l.b16 %v677
    %v711 = vunpack.c.l.b16 %v678
    %v712 = vunpack.c.l.b16 %v679
    %v713 = vunpack.c.l.b16 %v680
    %v714 = vunpack.c.l.b16 %v681
    %v715 = vrot.slane %v700, 7
    %v716 = vsel %vm366, %v715, %v699
    %v717 = vrot.slane %v701, 6
    %v718 = vsel %vm368, %v717, %v716
    %v719 = vrot.slane %v702, 5
    %v720 = vsel %vm370, %v719, %v718
    %v721 = vrot.slane %v703, 4
    %v722 = vsel %vm372, %v721, %v720
    %v723 = vrot.slane %v704, 3
    %v724 = vsel %vm374, %v723, %v722
    %v725 = vrot.slane %v705, 2
    %v726 = vsel %vm376, %v725, %v724
    %v727 = vrot.slane %v706, 1
    %v728 = vsel %vm378, %v727, %v726
    %v729 = vrot.slane %v708, 7
    %v730 = vsel %vm366, %v729, %v707
    %v731 = vrot.slane %v709, 6
    %v732 = vsel %vm368, %v731, %v730
    %v733 = vrot.slane %v710, 5
    %v734 = vsel %vm370, %v733, %v732
    %v735 = vrot.slane %v711, 4
    %v736 = vsel %vm372, %v735, %v734
    %v737 = vrot.slane %v712, 3
    %v738 = vsel %vm374, %v737, %v736
    %v739 = vrot.slane %v713, 2
    %v740 = vsel %vm376, %v739, %v738
    %v741 = vrot.slane %v714, 1
    %v742 = vsel %vm378, %v741, %v740
    %v743 = vpack.c.b16 %v742, %v728
    %v745 = vsel %vm104, %v743, 0
    %vm747 = vcmask 1041408
    %v749 = vsel %vm747, %v682, 0
    %751 = vmatprep.subr.bf16.mxu0 0
    %752 = vmatpush1.bf16.msra.mxu0 %v749
    %753 = vmatprep.subr.bf16.mxu0 0
    %754 = vmatpush1.bf16.msra.mxu0 0
    %755 = vmatprep.subr.bf16.mxu0 0
    %756 = vmatpush1.bf16.msra.mxu0 0
    %757 = vmatprep.subr.bf16.mxu0 0
    %758 = vmatpush1.bf16.msra.mxu0 0
    %759 = vmatprep.subr.bf16.mxu0 0
    %760 = vmatpush1.bf16.msra.mxu0 0
    %761 = vmatprep.subr.bf16.mxu0 0
    %762 = vmatpush1.bf16.msra.mxu0 0
    %763 = vmatprep.subr.bf16.mxu0 0
    %764 = vmatpush1.bf16.msra.mxu0 0
    %765 = vmatprep.subr.bf16.mxu0 0
    %766 = vmatpush1.bf16.msra.mxu0 0
    %767 = vmatprep.subr.bf16.mxu0 0
    %768 = vmatpush1.bf16.msra.mxu0 0
    %769 = vmatprep.subr.bf16.mxu0 0
    %770 = vmatpush1.bf16.msra.mxu0 0
    %771 = vmatprep.subr.bf16.mxu0 0
    %772 = vmatpush1.bf16.msra.mxu0 0
    %773 = vmatprep.subr.bf16.mxu0 0
    %774 = vmatpush1.bf16.msra.mxu0 0
    %775 = vmatprep.subr.bf16.mxu0 0
    %776 = vmatpush1.bf16.msra.mxu0 0
    %777 = vmatprep.subr.bf16.mxu0 0
    %778 = vmatpush1.bf16.msra.mxu0 0
    %779 = vmatprep.subr.bf16.mxu0 0
    %780 = vmatpush1.bf16.msra.mxu0 0
    %781 = vmatprep.subr.bf16.mxu0 0
    %782 = vmatpush1.bf16.msra.mxu0 0
    %783 = vmatprep.mubr.bf16.mxu0 0
    %784 = vmatmul.mubr.bf16.gmra.mrb[0].mxu0 %v745
    %v785 = vpop.f32.mrb[0].mxu0
    %v786 = vadd.f32 0.0, %v785
    %v787 = vpop.f32.mrb[0].mxu0
    %v788 = vpop.f32.mrb[0].mxu0
    %v789 = vadd.f32 0.0, %v788
    %v790 = vpop.f32.mrb[0].mxu0
    %791 = vdwg.mxu0
    %v795 = vunpack.c.l.b16 %v507
    %v796 = vunpack.c.l.b16 %v508
    %v797 = vunpack.c.l.b16 %v509
    %v798 = vpack.c.b16 %v796, %v795
    %v799 = vpack.c.b16 %v797, %v797
    %vm801 = vcmask 195584
    %v803 = vsel %vm801, %v506, 0
    %vm805 = vcmask 1043456
    %v807 = vsel %vm805, %v799, 0
    %809 = vmatprep.subr.bf16.mxu0 0
    %810 = vmatpush1.bf16.msra.mxu0 %v798
    %811 = vmatprep.subr.bf16.mxu0 0
    %812 = vmatpush1.bf16.msra.mxu0 %v807
    %813 = vmatprep.subr.bf16.mxu0 0
    %814 = vmatpush1.bf16.msra.mxu0 0
    %815 = vmatprep.subr.bf16.mxu0 0
    %816 = vmatpush1.bf16.msra.mxu0 0
    %817 = vmatprep.subr.bf16.mxu0 0
    %818 = vmatpush1.bf16.msra.mxu0 0
    %819 = vmatprep.subr.bf16.mxu0 0
    %820 = vmatpush1.bf16.msra.mxu0 0
    %821 = vmatprep.subr.bf16.mxu0 0
    %822 = vmatpush1.bf16.msra.mxu0 0
    %823 = vmatprep.subr.bf16.mxu0 0
    %824 = vmatpush1.bf16.msra.mxu0 0
    %825 = vmatprep.subr.bf16.mxu0 0
    %826 = vmatpush1.bf16.msra.mxu0 0
    %827 = vmatprep.subr.bf16.mxu0 0
    %828 = vmatpush1.bf16.msra.mxu0 0
    %829 = vmatprep.subr.bf16.mxu0 0
    %830 = vmatpush1.bf16.msra.mxu0 0
    %831 = vmatprep.subr.bf16.mxu0 0
    %832 = vmatpush1.bf16.msra.mxu0 0
    %833 = vmatprep.subr.bf16.mxu0 0
    %834 = vmatpush1.bf16.msra.mxu0 0
    %835 = vmatprep.subr.bf16.mxu0 0
    %836 = vmatpush1.bf16.msra.mxu0 0
    %837 = vmatprep.subr.bf16.mxu0 0
    %838 = vmatpush1.bf16.msra.mxu0 0
    %839 = vmatprep.subr.bf16.mxu0 0
    %840 = vmatpush1.bf16.msra.mxu0 0
    %841 = vmatprep.mubr.bf16.mxu0 0
    %842 = vmatmul.mubr.bf16.gmra.mrb[0].mxu0 %v803
    %v843 = vpop.f32.mrb[0].mxu0
    %v844 = vadd.f32 %v786, %v843
    %v845 = vpop.f32.mrb[0].mxu0
    %v846 = vpop.f32.mrb[0].mxu0
    %v847 = vadd.f32 %v789, %v846
    %v848 = vpop.f32.mrb[0].mxu0
    %849 = vdwg.mxu0
    %850 = vst.msk [vmem:[#allocation4] sm:$0xff] %vm109, %v844
    %851 = vst.msk [vmem:[#allocation4 + $0x8] sm:$0xff] %vm109, %v847
    %v852 = vlaneseq
    %v853 = vshrl.u32 %v852, 7
    %v854 = vsub.s32 1, %v853
    %v855 = vrot.slane %v28, %v854
    %v856 = vmul.f32 %v844, %v855
    %v857 = vmul.f32 %v847, %v855
    %v858 = vlaneseq
    %v859 = vshrl.u32 %v858, 7
    %v860 = vsub.s32 2, %v859
    %v861 = vrot.slane %v28, %v860
    %v862 = vadd.f32 %v856, %v861
    %v863 = vadd.f32 %v857, %v861
    %vm864 = vcmp.ge.f32.partialorder %v862, 0.0
    %vm865 = vcmp.ge.f32.partialorder %v863, 0.0
    %v866 = vmul.f32 %v862, 0.01
    %v867 = vmul.f32 %v863, 0.01
    %v868 = vsel %vm864, %v862, %v866
    %v869 = vsel %vm865, %v863, %v867
    %870 = vst.msk [vmem:[#allocation2] sm:$0xff] %vm109, %v868
    %871 = vst.msk [vmem:[#allocation2 + $0x8] sm:$0xff] %vm109, %v869
    // Predicated region
    $region26: #{tpu_custom_call.1} parent=1 // pred_check
      _
    $region27: #{tpu_custom_call.1} parent=1 // pred_check_branch
      %873 = sbr.rel (0) target = $region29
    $region28: #{tpu_custom_call.1} parent=1 // pred_region
      %s875 = ssub.s32 256, 256
      %876 = vsyncadd [#allocation3], %s875
      %s877 = sshll.u32 [#allocation2], 4
      %s878 = int_to_ptr.vmem [resolvable:$true] %s877
      %883 = dma.vmem_to_hbm [thread:$0]  %s878, 256, %s6, [#allocation3], 128, 128, 8
    $region29: #{tpu_custom_call.1} parent=1 // pred_fallthru
      _
    // Predicated region
    $region30: #{tpu_custom_call.1} parent=1 // pred_check
      _
    $region31: #{tpu_custom_call.1} parent=1 // pred_check_branch
      %885 = sbr.rel (0) target = $region33
    $region32: #{tpu_custom_call.1} parent=1 // pred_region
      %s887 = ssub.s32 256, 256
      %888 = vsyncadd [#allocation5], %s887
      %s889 = sshll.u32 [#allocation4], 4
      %s890 = int_to_ptr.vmem [resolvable:$true] %s889
      %895 = dma.vmem_to_hbm [thread:$0]  %s890, 256, %s7, [#allocation5], 128, 128, 8
    $region33: #{tpu_custom_call.1} parent=1 // pred_fallthru
      _
    // Predicated region
    $region34: #{tpu_custom_call.1} parent=1 // pred_check
      _
    $region35: #{tpu_custom_call.1} parent=1 // pred_check_branch
      %897 = sbr.rel (0) target = $region37
    $region36: #{tpu_custom_call.1} parent=1 // pred_region
      %898 = dma.done [#allocation3], 256
    $region37: #{tpu_custom_call.1} parent=1 // pred_fallthru
      _
    // Predicated region
    $region38: #{tpu_custom_call.1} parent=1 // pred_check
      _
    $region39: #{tpu_custom_call.1} parent=1 // pred_check_branch
      %900 = sbr.rel (0) target = $region41
    $region40: #{tpu_custom_call.1} parent=1 // pred_region
      %901 = dma.done [#allocation5], 256
    $region41: #{tpu_custom_call.1} parent=1 // pred_fallthru
      _
    %902 = vsyncpa [#allocation3], 1
    %903 = vsyncpa [#allocation5], 1

</llo_original>
